<compile_context>
chip_gen: v6e
topology: v6e:2x2x1
jax: 0.10.0
libtpu: 0.0.40
codegen_flags: <defaults>
</compile_context>

<pallas_src>
import jax
import jax.numpy as jnp
from jax.experimental import pallas as pl
from jax.experimental.pallas import tpu as pltpu

LANES = 128
_MIN_MULTIBLOCK_BYTES = 512 * 1024   # above this, force a multi-block grid
_FALLBACK_VMEM_CAPACITY = 64 << 20   # conservative if the HW query fails


def _ab_kernel(x_ref, o_ref):
    # Elementwise (x + 1) * 5 on the whole VMEM tile.
    one = jnp.asarray(1, x_ref.dtype)
    five = jnp.asarray(5, x_ref.dtype)
    o_ref[...] = (x_ref[...] + one) * five


def _round_up(a: int, b: int) -> int:
    return ((a + b - 1) // b) * b


def _cdiv(a: int, b: int) -> int:
    return -(-a // b)


def _sublane_pack(dtype) -> int:
    # Native sublane packing: 8 for 32-bit, 16 for 16-bit, 32 for 8-bit dtypes.
    itemsize = jnp.dtype(dtype).itemsize
    return max(8, 32 // max(1, itemsize))


def _vmem_capacity_bytes() -> int:
    try:
        return int(pltpu.get_tpu_info().vmem_capacity_bytes)
    except Exception:
        return _FALLBACK_VMEM_CAPACITY


def _run_slab(slab: jax.Array) -> jax.Array:
    """Run the elementwise kernel over a lane-dense (rows, 128) slab."""
    rows, cols = slab.shape
    dtype = slab.dtype
    itemsize = jnp.dtype(dtype).itemsize
    sub = _sublane_pack(dtype)
    total_bytes = rows * cols * itemsize

    cap = _vmem_capacity_bytes()
    # ~8 MiB per block, but never more than cap // 8 so double-buffered
    # in+out (4x block) stays well under physical VMEM on every generation.
    block_bytes = min(8 << 20, cap // 8)
    target_rows = max(sub, block_bytes // (cols * itemsize))

    # Number of blocks: at least 4 (and an even count) once the array is big
    # enough that DMA overlap / two-TensorCore streaming matters.
    nblocks = _cdiv(rows, target_rows)
    if total_bytes >= _MIN_MULTIBLOCK_BYTES:
        nblocks = max(nblocks, 4)
    if nblocks > 1 and nblocks % 2:
        nblocks += 1

    if nblocks <= 1:
        # Full-extent single block: always layout-legal, even for odd rows.
        tile_rows = rows
    else:
        # Balanced blocks, rounded up to the sublane pack so vld/vst stay
        # unmasked; no nearly-empty trailing block.
        tile_rows = min(rows, _round_up(_cdiv(rows, nblocks), sub))

    grid = (pl.cdiv(rows, tile_rows),)

    # Explicit scoped-VMEM limit: double-buffered in+out blocks plus headroom,
    # clamped to 3/4 of physical capacity (48 MiB on v7x, 48-96 MiB elsewhere).
    needed = 4 * tile_rows * cols * itemsize
    vmem_limit = int(min(cap * 3 // 4, max(needed + (16 << 20), 32 << 20)))

    return pl.pallas_call(
        _ab_kernel,
        out_shape=jax.ShapeDtypeStruct((rows, cols), dtype),
        grid_spec=pltpu.PrefetchScalarGridSpec(
            num_scalar_prefetch=0,
            grid=grid,
            in_specs=[pl.BlockSpec((tile_rows, cols), lambda i: (i, 0))],
            out_specs=pl.BlockSpec((tile_rows, cols), lambda i: (i, 0)),
        ),
        compiler_params=pltpu.CompilerParams(
            dimension_semantics=("parallel",),
            vmem_limit_bytes=vmem_limit,
        ),
    )(slab)


def ab_forward(x: jax.Array) -> jax.Array:
    """Computes (x + 1) * 5 via a Pallas TPU kernel. Works for any shape."""
    orig_shape = x.shape
    n = x.size

    if n == 0:
        return x

    if n % LANES == 0:
        # Fast path: metadata-only reshape to a lane-dense (rows, 128) slab.
        rows = n // LANES
        return _run_slab(x.reshape(rows, LANES)).reshape(orig_shape)

    # Ragged fallback: kernel on the 128-aligned prefix, <=127-element tail in
    # plain jnp, then concatenate. No full-tensor pad/slice HBM round-trips.
    flat = x.reshape(-1)
    n_aligned = (n // LANES) * LANES
    one = jnp.asarray(1, x.dtype)
    five = jnp.asarray(5, x.dtype)
    tail = (flat[n_aligned:] + one) * five
    if n_aligned == 0:
        return tail.reshape(orig_shape)
    prefix = _run_slab(flat[:n_aligned].reshape(n_aligned // LANES, LANES))
    return jnp.concatenate([prefix.reshape(-1), tail]).reshape(orig_shape)


if __name__ == "__main__":
    key = jax.random.PRNGKey(0)
    # Small example consistent with a generic NCHW tensor: batch=2, channels=4, 16x16 spatial.
    x = jax.random.normal(key, (2, 4, 16, 16), dtype=jnp.float32)

    y = jax.block_until_ready(ab_forward(x))

    # Reference check in plain JAX.
    y_ref = (x + 1.0) * 5.0
    assert y.shape == x.shape and y.dtype == x.dtype
    assert jnp.allclose(y, y_ref, atol=1e-6, rtol=1e-6)

    print("KERNEL_OK")
</pallas_src>

<mosaic_0001>
module attributes {stable_mosaic.version = 11 : i64} {
  func.func @_ab_kernel(%arg0: i32, %arg1: memref<16x128xf32, #tpu.memory_space<vmem>>, %arg2: memref<16x128xf32, #tpu.memory_space<vmem>>) attributes {dimension_semantics = [#tpu.dimension_semantics<parallel>], iteration_bounds = array<i64: 1>, scalar_prefetch = 0 : i64, scratch_operands = 0 : i64, tpu.core_type = #tpu.core_type<tc>, window_params = [{transform_indices = @transform_0, window_bounds = array<i64: 16, 128>}, {transform_indices = @transform_1, window_bounds = array<i64: 16, 128>}]} {
    %c0 = arith.constant 0 : index
    %c0_0 = arith.constant 0 : index
    %0 = vector.load %arg1[%c0, %c0_0] : memref<16x128xf32, #tpu.memory_space<vmem>>, vector<16x128xf32>
    %cst = arith.constant 1.000000e+00 : f32
    %1 = vector.broadcast %cst : f32 to vector<16x128xf32>
    %2 = arith.addf %0, %1 : vector<16x128xf32>
    %cst_1 = arith.constant 5.000000e+00 : f32
    %3 = vector.broadcast %cst_1 : f32 to vector<16x128xf32>
    %4 = arith.mulf %2, %3 : vector<16x128xf32>
    %c0_2 = arith.constant 0 : index
    %c0_3 = arith.constant 0 : index
    %5 = vector.load %arg2[%c0_2, %c0_3] : memref<16x128xf32, #tpu.memory_space<vmem>>, vector<16x128xf32>
    tpu.vector_store %arg2[%c0_2, %c0_3], %4 {strides = array<i32>} : memref<16x128xf32, #tpu.memory_space<vmem>>, vector<16x128xf32>,
    return
  }
  func.func @transform_0(%arg0: i32) -> (i32, i32) {
    %c0_i32 = arith.constant 0 : i32
    %c0_i32_0 = arith.constant 0 : i32
    return %arg0, %c0_i32 : i32, i32
  }
  func.func @transform_1(%arg0: i32) -> (i32, i32) {
    %c0_i32 = arith.constant 0 : i32
    %c0_i32_0 = arith.constant 0 : i32
    return %arg0, %c0_i32 : i32, i32
  }
}

</mosaic_0001>

<llo_original>
// kernel: tpu_custom_call.1
$region0: #{tpu_custom_call.1}
  #allocation0 [shape = 'u32[]', space=smem, size = 0x4, offset = 0x4, fixed_abs, tag = 'smem constant byte address 0x4 - core index']
  #allocation1 [shape = 'u32[144,128]{1,0:T(1,128)}', space=vmem, size = 0x12000, scoped, tag = 'internal scratch']
  %s0 = inlined_call_operand.hbm [shape: f32[16,128], index: 0, kind: input, shape index: {}]
  %s1 = inlined_call_operand.hbm [shape: f32[16,128], index: 1, kind: output, shape index: {}]
  %s2 = sld [smem:[#allocation0]]
  $region18: #{tpu_custom_call.1} parent=0
    _
  %s4 = ssub.s32 1, %s2
  %s5 = scalar_select 0, %s4, %s2
  $region1: #{tpu_custom_call.1} parent=0
    #allocation2 [shape = 'u8[8192]{0}', space=vmem, size = 0x2000, scoped, tag = 'input window, operand 0, single buffered']
    #allocation3 [shape = 's32[1]{0}', space=sflag, size = 0x4, scoped, tag = 'scoped memory for tpu_custom_call.1']
    #allocation4 [shape = 's32[1]{0}', space=sflag, size = 0x4, scoped, tag = 'scoped memory for tpu_custom_call.1']
    #allocation5 [shape = 'u8[8192]{0}', space=vmem, size = 0x2000, scoped, tag = 'output window, operand 0, single buffered']
    %6 = vsyncpa [#allocation3], 0
    %7 = vsyncpa [#allocation4], 0
    // Predicated region
    $region2: #{tpu_custom_call.1} parent=1 // pred_check
      _
    $region3: #{tpu_custom_call.1} parent=1 // pred_check_branch
      %9 = sbr.rel (0) target = $region5
    $region4: #{tpu_custom_call.1} parent=1 // pred_region
      %s11 = ssub.s32 256, 256
      %12 = vsyncadd [#allocation3], %s11
      %s13 = sshll.u32 [#allocation2], 4
      %s14 = int_to_ptr.vmem [resolvable:$true] %s13
      %19 = dma.hbm_to_vmem [thread:$0]  %s0, 256, %s14, [#allocation3], 128, 128, 8
    $region5: #{tpu_custom_call.1} parent=1 // pred_fallthru
      _
    // Predicated region
    $region6: #{tpu_custom_call.1} parent=1 // pred_check
      _
    $region7: #{tpu_custom_call.1} parent=1 // pred_check_branch
      %21 = sbr.rel (0) target = $region9
    $region8: #{tpu_custom_call.1} parent=1 // pred_region
      %22 = dma.done [#allocation3], 256
    $region9: #{tpu_custom_call.1} parent=1 // pred_fallthru
      _
    %v23 = vld [vmem:[#allocation2] sm:$0xff]
    %v24 = vld [vmem:[#allocation2 + $0x8] sm:$0xff]
    %v25 = vadd.f32 %v23, 1.0
    %v26 = vadd.f32 %v24, 1.0
    %v27 = vmul.f32 %v25, 5.0
    %v28 = vmul.f32 %v26, 5.0
    %29 = vst [vmem:[#allocation5] sm:$0xff] %v27
    %30 = vst [vmem:[#allocation5 + $0x8] sm:$0xff] %v28
    // Predicated region
    $region10: #{tpu_custom_call.1} parent=1 // pred_check
      _
    $region11: #{tpu_custom_call.1} parent=1 // pred_check_branch
      %32 = sbr.rel (0) target = $region13
    $region12: #{tpu_custom_call.1} parent=1 // pred_region
      %s34 = ssub.s32 256, 256
      %35 = vsyncadd [#allocation4], %s34
      %s36 = sshll.u32 [#allocation5], 4
      %s37 = int_to_ptr.vmem [resolvable:$true] %s36
      %42 = dma.vmem_to_hbm [thread:$0]  %s37, 256, %s1, [#allocation4], 128, 128, 8
    $region13: #{tpu_custom_call.1} parent=1 // pred_fallthru
      _
    // Predicated region
    $region14: #{tpu_custom_call.1} parent=1 // pred_check
      _
    $region15: #{tpu_custom_call.1} parent=1 // pred_check_branch
      %44 = sbr.rel (0) target = $region17
    $region16: #{tpu_custom_call.1} parent=1 // pred_region
      %45 = dma.done [#allocation4], 256
    $region17: #{tpu_custom_call.1} parent=1 // pred_fallthru
      _
    %46 = vsyncpa [#allocation3], 1
    %47 = vsyncpa [#allocation4], 1

</llo_original>
